<compile_context>
chip_gen: v5e
topology: v5e:2x2
jax: 0.10.0
libtpu: 0.0.40
codegen_flags: <defaults>
</compile_context>

<pallas_src>
import numpy as np
import jax
import jax.numpy as jnp
from jax import lax
from jax.experimental import pallas as pl
from jax.experimental.pallas import tpu as pltpu


def make_kernel(sigma: float):
    sigma = float(sigma)
    inv_1p_sigma = 1.0 / (1.0 + sigma)

    def kernel(kdd_ref, kdc_ref, rho_ref, tm_ref, out_ref):
        kdd = kdd_ref[...]   # [N, N]  exp(-dis_mtx_density / sigma)
        kdc = kdc_ref[...]   # [M, N]  exp(-dis_mtx_cross / sigma)
        rho = rho_ref[...]   # (1, N)  pre_density
        tm = tm_ref[...]     # (1, M)  target_mass

        N = kdd.shape[0]
        M = kdc.shape[0]

        # c_transform(D - v[:,None], alpha)[b]
        #   = -log( sum_a exp(-D[a,b]) * exp(v[a]) * alpha[a] + 1e-7 )
        #   = -log( (alpha * exp(v)) @ exp(-D) + 1e-7 )
        # so the hot loop is: O(N) exp -> one MXU matvec -> O(N) log.

        # ---------------- loop 1: p_auto fixed point (max 20 iters) -------------
        def cond1(state):
            i, _, diff = state
            return jnp.logical_and(i < 20, diff >= 1e-4)

        def body1(state):
            i, p, _ = state                                          # p: (1, N)
            w = rho * jnp.exp(p)                                     # (1, N)
            s = jnp.dot(w, kdd, preferred_element_type=jnp.float32)  # (1, N)
            c = -jnp.log(s + 1e-7)
            p_new = 0.5 * (p + c)
            diff = sigma * jnp.mean(jnp.abs(p_new - p))
            return (i + 1, p_new, diff)

        _, p, _ = lax.while_loop(
            cond1, body1,
            (jnp.int32(0),
             jnp.zeros((1, N), jnp.float32),
             jnp.array(jnp.inf, jnp.float32)))

        # ---------------- loop 2: (f, g) fixed point (max 200 iters) ------------
        def cond2(state):
            i, _, _, diff = state
            return jnp.logical_and(i < 200, diff >= 1e-4)

        def body2(state):
            i, g, f, _ = state                                       # g: (1, M), f: (1, N)
            # f = c_transform(dc - g[:,None], target_mass) / (1 + sigma)
            wg = tm * jnp.exp(g)                                     # (1, M)
            sf = jnp.dot(wg, kdc, preferred_element_type=jnp.float32)  # (1, N)
            f_new = -jnp.log(sf + 1e-7) * inv_1p_sigma
            # g = c_transform(dc.T - f[:,None], pre_density)
            #   = -log( (rho * exp(f)) contracted with kdc over its last dim )
            wf = rho * jnp.exp(f_new)                                # (1, N)
            sg = lax.dot_general(wf, kdc,
                                 dimension_numbers=(((1,), (1,)), ((), ())),
                                 preferred_element_type=jnp.float32)  # (1, M)
            g_new = -jnp.log(sg + 1e-7)
            diff = sigma * jnp.mean(jnp.abs(g_new - g))
            return (i + 1, g_new, f_new, diff)

        _, g, f, _ = lax.while_loop(
            cond2, body2,
            (jnp.int32(0),
             jnp.zeros((1, M), jnp.float32),
             jnp.zeros((1, N), jnp.float32),
             jnp.array(jnp.inf, jnp.float32)))

        # ---------------- finalize ----------------------------------------------
        wp = rho * jnp.exp(p)
        p_fin = -jnp.log(jnp.dot(wp, kdd, preferred_element_type=jnp.float32) + 1e-7)
        p_fin = p_fin * sigma                                        # (1, N)
        g = g * sigma                                                # (1, M)
        f = f * sigma                                                # (1, N)
        f = 1.0 - jnp.exp(-f)

        term1 = jnp.sum((f - p_fin) * rho, keepdims=True)            # (1, 1)
        term2 = jnp.sum(tm * g, keepdims=True)                       # (1, 1)
        out_ref[...] = (term1 + term2) * 1000.0

    return kernel


def make_weight_vec_ent_sink(dis_mtx_cross, dis_mtx_density, sigma):
    """Mirrors Weight_Vec_Ent_Sink.__init__ + forward."""
    dc = jnp.asarray(dis_mtx_cross, jnp.float32) / sigma   # [M, N]
    dd = jnp.asarray(dis_mtx_density, jnp.float32) / sigma  # [N, N]

    # Gibbs kernels precomputed once (module constants); no transpose copy needed.
    kdd = jnp.exp(-dd)   # [N, N]
    kdc = jnp.exp(-dc)   # [M, N]

    kernel = make_kernel(sigma)
    vmem = pl.BlockSpec(memory_space=pltpu.MemorySpace.VMEM)

    # Scoped VMEM sized to the actual resident set + headroom, clamped to the
    # v7x per-core physical budget (64 MiB).
    resident_bytes = int((kdd.size + kdc.size) * 4)
    vmem_limit = int(min(max(2 * resident_bytes + (4 << 20), 16 << 20), 64 << 20))

    call = pl.pallas_call(
        kernel,
        out_shape=jax.ShapeDtypeStruct((1, 1), jnp.float32),
        in_specs=[vmem] * 4,
        out_specs=vmem,
        compiler_params=pltpu.CompilerParams(vmem_limit_bytes=vmem_limit),
    )

    def forward(pre_density, target_mass):
        rho = jnp.asarray(pre_density, jnp.float32).reshape(1, -1)   # (1, N)
        tm = jnp.asarray(target_mass, jnp.float32).reshape(1, -1)    # (1, M)
        out = call(kdd, kdc, rho, tm)
        return out[0, 0]

    return forward


# ---------------- pure-numpy reference (mirrors the PyTorch code) ---------------
def reference(dc_scaled, dd_scaled, pre_density, target_mass, sigma):
    dc = np.asarray(dc_scaled, np.float32)
    dd = np.asarray(dd_scaled, np.float32)
    rho = np.asarray(pre_density, np.float32)
    tm = np.asarray(target_mass, np.float32)

    def c_tr(pow_dis, alpha):
        s = np.sum(np.exp(-pow_dis) * alpha[:, None], axis=0)
        return -np.log(s + 1e-7)

    M, N = dc.shape
    g = np.zeros(M, np.float32)
    f = np.zeros(N, np.float32)
    p = np.zeros(N, np.float32)
    for _ in range(20):
        p_pre = p
        p = 0.5 * (p + c_tr(dd - p[:, None], rho))
        if sigma * np.mean(np.abs(p - p_pre)) < 1e-4:
            break
    for _ in range(200):
        g_pre = g
        f = c_tr(dc - g[:, None], tm) / (1 + sigma)
        g = c_tr(dc.T - f[:, None], rho)
        if sigma * np.mean(np.abs(g - g_pre)) < 1e-4:
            break
    p = c_tr(dd - p[:, None], rho) * sigma
    g = g * sigma
    f = f * sigma
    f = -np.exp(-f) + 1
    w = np.sum((f - p) * rho) + np.sum(tm * g)
    return np.float32(w * 1000)


if __name__ == "__main__":
    # Small, deterministic synthetic problem.
    N, M = 16, 8          # density points, target points
    sigma = 0.1

    key = jax.random.PRNGKey(0)
    k1, k2, k3, k4 = jax.random.split(key, 4)

    pts_density = jax.random.uniform(k1, (N, 2), dtype=jnp.float32)
    pts_target = jax.random.uniform(k2, (M, 2), dtype=jnp.float32)

    # squared pairwise distances
    def sqdist(a, b):
        d = a[:, None, :] - b[None, :, :]
        return jnp.sum(d * d, axis=-1)

    dis_mtx_density = sqdist(pts_density, pts_density)   # (N, N)
    dis_mtx_cross = sqdist(pts_target, pts_density)      # (M, N)

    u = jax.random.uniform(k3, (N,), dtype=jnp.float32) + 0.1
    pre_density = u / jnp.sum(u)                          # (N,)
    v = jax.random.uniform(k4, (M,), dtype=jnp.float32) + 0.1
    target_mass = v / jnp.sum(v)                          # (M,)

    fwd = make_weight_vec_ent_sink(dis_mtx_cross, dis_mtx_density, sigma)
    w_c_dis = fwd(pre_density, target_mass)
    w_c_dis = jax.block_until_ready(w_c_dis)

    ref = reference(np.asarray(dis_mtx_cross) / sigma,
                    np.asarray(dis_mtx_density) / sigma,
                    pre_density, target_mass, sigma)

    np.testing.assert_allclose(np.asarray(w_c_dis), ref, rtol=5e-3, atol=5e-2)
    print("KERNEL_OK")
</pallas_src>

<mosaic_0001>
module attributes {stable_mosaic.version = 11 : i64} {
  func.func @kernel(%arg0: memref<16x16xf32, #tpu.memory_space<vmem>>, %arg1: memref<8x16xf32, #tpu.memory_space<vmem>>, %arg2: memref<1x16xf32, #tpu.memory_space<vmem>>, %arg3: memref<1x8xf32, #tpu.memory_space<vmem>>, %arg4: memref<1x1xf32, #tpu.memory_space<vmem>>) attributes {dimension_semantics = [], scalar_prefetch = 0 : i64, scratch_operands = 0 : i64, tpu.core_type = #tpu.core_type<tc>} {
    %c0 = arith.constant 0 : index
    %c0_0 = arith.constant 0 : index
    %0 = vector.load %arg0[%c0, %c0_0] : memref<16x16xf32, #tpu.memory_space<vmem>>, vector<16x16xf32>
    %c0_1 = arith.constant 0 : index
    %c0_2 = arith.constant 0 : index
    %1 = vector.load %arg1[%c0_1, %c0_2] : memref<8x16xf32, #tpu.memory_space<vmem>>, vector<8x16xf32>
    %c0_3 = arith.constant 0 : index
    %c0_4 = arith.constant 0 : index
    %2 = vector.load %arg2[%c0_3, %c0_4] : memref<1x16xf32, #tpu.memory_space<vmem>>, vector<1x16xf32>
    %c0_5 = arith.constant 0 : index
    %c0_6 = arith.constant 0 : index
    %3 = vector.load %arg3[%c0_5, %c0_6] : memref<1x8xf32, #tpu.memory_space<vmem>>, vector<1x8xf32>
    %cst = arith.constant 0.000000e+00 : f32
    %4 = vector.broadcast %cst : f32 to vector<1x16xf32>
    %c0_i32 = arith.constant 0 : i32
    %cst_7 = arith.constant 0x7F800000 : f32
    %5:3 = scf.while (%arg5 = %c0_i32, %arg6 = %4, %arg7 = %cst_7) : (i32, vector<1x16xf32>, f32) -> (i32, vector<1x16xf32>, f32) {
      %c20_i32 = arith.constant 20 : i32
      %45 = arith.cmpi slt, %arg5, %c20_i32 : i32
      %cst_25 = arith.constant 9.99999974E-5 : f32
      %46 = arith.cmpf oge, %arg7, %cst_25 : f32
      %47 = arith.andi %45, %46 : i1
      scf.condition(%47) %arg5, %arg6, %arg7 : i32, vector<1x16xf32>, f32
    } do {
    ^bb0(%arg5: i32, %arg6: vector<1x16xf32>, %arg7: f32):
      %45 = math.exp %arg6 : vector<1x16xf32>
      %46 = arith.mulf %2, %45 : vector<1x16xf32>
      %cst_25 = arith.constant dense<0.000000e+00> : vector<1x16xf32>
      %47 = tpu.matmul %46, %0, %cst_25 {dimension_numbers = #tpu.dot_dimension_numbers<[1], [0], [0], [1], [0, 0, 1, 1], [], []>} : vector<1x16xf32>, vector<16x16xf32>, vector<1x16xf32> -> vector<1x16xf32>
      %cst_26 = arith.constant 1.000000e-07 : f32
      %48 = vector.broadcast %cst_26 : f32 to vector<1x16xf32>
      %49 = arith.addf %47, %48 : vector<1x16xf32>
      %50 = math.log %49 : vector<1x16xf32>
      %cst_27 = arith.constant 0.000000e+00 : f32
      %51 = vector.broadcast %cst_27 : f32 to vector<1x16xf32>
      %52 = arith.subf %51, %50 : vector<1x16xf32>
      %53 = arith.addf %arg6, %52 : vector<1x16xf32>
      %cst_28 = arith.constant 5.000000e-01 : f32
      %54 = vector.broadcast %cst_28 : f32 to vector<1x16xf32>
      %55 = arith.mulf %54, %53 : vector<1x16xf32>
      %56 = arith.subf %55, %arg6 : vector<1x16xf32>
      %57 = math.absf %56 : vector<1x16xf32>
      %58 = vector.shape_cast %57 : vector<1x16xf32> to vector<1x1x16xf32>
      %cst_29 = arith.constant dense<0.000000e+00> : vector<1xf32>
      %59 = vector.multi_reduction <add>, %58, %cst_29 [1, 2] : vector<1x1x16xf32> to vector<1xf32>
      %60 = vector.shape_cast %59 : vector<1xf32> to vector<1x1x1xf32>
      %61 = vector.extract %60[0, 0, 0] : f32 from vector<1x1x1xf32>
      %cst_30 = arith.constant 1.600000e+01 : f32
      %62 = arith.divf %61, %cst_30 : f32
      %cst_31 = arith.constant 1.000000e-01 : f32
      %63 = arith.mulf %cst_31, %62 : f32
      %c1_i32 = arith.constant 1 : i32
      %64 = arith.addi %arg5, %c1_i32 : i32
      scf.yield %64, %55, %63 : i32, vector<1x16xf32>, f32
    }
    %cst_8 = arith.constant 0.000000e+00 : f32
    %6 = vector.broadcast %cst_8 : f32 to vector<1x8xf32>
    %cst_9 = arith.constant 0.000000e+00 : f32
    %7 = vector.broadcast %cst_9 : f32 to vector<1x16xf32>
    %c0_i32_10 = arith.constant 0 : i32
    %cst_11 = arith.constant 0x7F800000 : f32
    %8:4 = scf.while (%arg5 = %c0_i32_10, %arg6 = %6, %arg7 = %7, %arg8 = %cst_11) : (i32, vector<1x8xf32>, vector<1x16xf32>, f32) -> (i32, vector<1x8xf32>, vector<1x16xf32>, f32) {
      %c200_i32 = arith.constant 200 : i32
      %45 = arith.cmpi slt, %arg5, %c200_i32 : i32
      %cst_25 = arith.constant 9.99999974E-5 : f32
      %46 = arith.cmpf oge, %arg8, %cst_25 : f32
      %47 = arith.andi %45, %46 : i1
      scf.condition(%47) %arg5, %arg6, %arg7, %arg8 : i32, vector<1x8xf32>, vector<1x16xf32>, f32
    } do {
    ^bb0(%arg5: i32, %arg6: vector<1x8xf32>, %arg7: vector<1x16xf32>, %arg8: f32):
      %45 = math.exp %arg6 : vector<1x8xf32>
      %46 = arith.mulf %3, %45 : vector<1x8xf32>
      %cst_25 = arith.constant dense<0.000000e+00> : vector<1x16xf32>
      %47 = tpu.matmul %46, %1, %cst_25 {dimension_numbers = #tpu.dot_dimension_numbers<[1], [0], [0], [1], [0, 0, 1, 1], [], []>} : vector<1x8xf32>, vector<8x16xf32>, vector<1x16xf32> -> vector<1x16xf32>
      %cst_26 = arith.constant 1.000000e-07 : f32
      %48 = vector.broadcast %cst_26 : f32 to vector<1x16xf32>
      %49 = arith.addf %47, %48 : vector<1x16xf32>
      %50 = math.log %49 : vector<1x16xf32>
      %cst_27 = arith.constant 0.000000e+00 : f32
      %51 = vector.broadcast %cst_27 : f32 to vector<1x16xf32>
      %52 = arith.subf %51, %50 : vector<1x16xf32>
      %cst_28 = arith.constant 0.909090936 : f32
      %53 = vector.broadcast %cst_28 : f32 to vector<1x16xf32>
      %54 = arith.mulf %52, %53 : vector<1x16xf32>
      %55 = math.exp %54 : vector<1x16xf32>
      %56 = arith.mulf %2, %55 : vector<1x16xf32>
      %cst_29 = arith.constant dense<0.000000e+00> : vector<1x8xf32>
      %57 = tpu.matmul %56, %1, %cst_29 {dimension_numbers = #tpu.dot_dimension_numbers<[1], [1], [0], [0], [0, 0, 1, 0], [], []>} : vector<1x16xf32>, vector<8x16xf32>, vector<1x8xf32> -> vector<1x8xf32>
      %cst_30 = arith.constant 1.000000e-07 : f32
      %58 = vector.broadcast %cst_30 : f32 to vector<1x8xf32>
      %59 = arith.addf %57, %58 : vector<1x8xf32>
      %60 = math.log %59 : vector<1x8xf32>
      %cst_31 = arith.constant 0.000000e+00 : f32
      %61 = vector.broadcast %cst_31 : f32 to vector<1x8xf32>
      %62 = arith.subf %61, %60 : vector<1x8xf32>
      %63 = arith.subf %62, %arg6 : vector<1x8xf32>
      %64 = math.absf %63 : vector<1x8xf32>
      %65 = vector.shape_cast %64 : vector<1x8xf32> to vector<1x1x8xf32>
      %cst_32 = arith.constant dense<0.000000e+00> : vector<1xf32>
      %66 = vector.multi_reduction <add>, %65, %cst_32 [1, 2] : vector<1x1x8xf32> to vector<1xf32>
      %67 = vector.shape_cast %66 : vector<1xf32> to vector<1x1x1xf32>
      %68 = vector.extract %67[0, 0, 0] : f32 from vector<1x1x1xf32>
      %cst_33 = arith.constant 8.000000e+00 : f32
      %69 = arith.divf %68, %cst_33 : f32
      %cst_34 = arith.constant 1.000000e-01 : f32
      %70 = arith.mulf %cst_34, %69 : f32
      %c1_i32 = arith.constant 1 : i32
      %71 = arith.addi %arg5, %c1_i32 : i32
      scf.yield %71, %62, %54, %70 : i32, vector<1x8xf32>, vector<1x16xf32>, f32
    }
    %9 = math.exp %5#1 : vector<1x16xf32>
    %10 = arith.mulf %2, %9 : vector<1x16xf32>
    %cst_12 = arith.constant dense<0.000000e+00> : vector<1x16xf32>
    %11 = tpu.matmul %10, %0, %cst_12 {dimension_numbers = #tpu.dot_dimension_numbers<[1], [0], [0], [1], [0, 0, 1, 1], [], []>} : vector<1x16xf32>, vector<16x16xf32>, vector<1x16xf32> -> vector<1x16xf32>
    %cst_13 = arith.constant 1.000000e-07 : f32
    %12 = vector.broadcast %cst_13 : f32 to vector<1x16xf32>
    %13 = arith.addf %11, %12 : vector<1x16xf32>
    %14 = math.log %13 : vector<1x16xf32>
    %cst_14 = arith.constant 0.000000e+00 : f32
    %15 = vector.broadcast %cst_14 : f32 to vector<1x16xf32>
    %16 = arith.subf %15, %14 : vector<1x16xf32>
    %cst_15 = arith.constant 1.000000e-01 : f32
    %17 = vector.broadcast %cst_15 : f32 to vector<1x16xf32>
    %18 = arith.mulf %16, %17 : vector<1x16xf32>
    %cst_16 = arith.constant 1.000000e-01 : f32
    %19 = vector.broadcast %cst_16 : f32 to vector<1x8xf32>
    %20 = arith.mulf %8#1, %19 : vector<1x8xf32>
    %cst_17 = arith.constant 1.000000e-01 : f32
    %21 = vector.broadcast %cst_17 : f32 to vector<1x16xf32>
    %22 = arith.mulf %8#2, %21 : vector<1x16xf32>
    %cst_18 = arith.constant 0.000000e+00 : f32
    %23 = vector.broadcast %cst_18 : f32 to vector<1x16xf32>
    %24 = arith.subf %23, %22 : vector<1x16xf32>
    %25 = math.exp %24 : vector<1x16xf32>
    %cst_19 = arith.constant 1.000000e+00 : f32
    %26 = vector.broadcast %cst_19 : f32 to vector<1x16xf32>
    %27 = arith.subf %26, %25 : vector<1x16xf32>
    %28 = arith.subf %27, %18 : vector<1x16xf32>
    %29 = arith.mulf %28, %2 : vector<1x16xf32>
    %30 = vector.shape_cast %29 : vector<1x16xf32> to vector<1x1x16xf32>
    %cst_20 = arith.constant dense<0.000000e+00> : vector<1xf32>
    %31 = vector.multi_reduction <add>, %30, %cst_20 [1, 2] : vector<1x1x16xf32> to vector<1xf32>
    %32 = vector.shape_cast %31 : vector<1xf32> to vector<1x1x1xf32>
    %33 = vector.extract %32[0, 0, 0] : f32 from vector<1x1x1xf32>
    %34 = vector.broadcast %33 : f32 to vector<1x1xf32>
    %35 = arith.mulf %3, %20 : vector<1x8xf32>
    %36 = vector.shape_cast %35 : vector<1x8xf32> to vector<1x1x8xf32>
    %cst_21 = arith.constant dense<0.000000e+00> : vector<1xf32>
    %37 = vector.multi_reduction <add>, %36, %cst_21 [1, 2] : vector<1x1x8xf32> to vector<1xf32>
    %38 = vector.shape_cast %37 : vector<1xf32> to vector<1x1x1xf32>
    %39 = vector.extract %38[0, 0, 0] : f32 from vector<1x1x1xf32>
    %40 = vector.broadcast %39 : f32 to vector<1x1xf32>
    %41 = arith.addf %34, %40 : vector<1x1xf32>
    %cst_22 = arith.constant 1.000000e+03 : f32
    %42 = vector.broadcast %cst_22 : f32 to vector<1x1xf32>
    %43 = arith.mulf %41, %42 : vector<1x1xf32>
    %c0_23 = arith.constant 0 : index
    %c0_24 = arith.constant 0 : index
    %44 = vector.load %arg4[%c0_23, %c0_24] : memref<1x1xf32, #tpu.memory_space<vmem>>, vector<1x1xf32>
    tpu.vector_store %arg4[%c0_23, %c0_24], %43 {strides = array<i32>} : memref<1x1xf32, #tpu.memory_space<vmem>>, vector<1x1xf32>,
    return
  }
}

</mosaic_0001>

<llo_original>
// kernel: tpu_custom_call.1
$region0: #{tpu_custom_call.1}
  #allocation0 [shape = 'u32[]', space=smem, size = 0x4, offset = 0x4, fixed_abs, tag = 'smem constant byte address 0x4 - core index']
  #allocation1 [shape = 'u32[72,128]{1,0:T(1,128)}', space=vmem, size = 0x9000, scoped, tag = 'internal scratch']
  %s0 = inlined_call_operand.hbm [shape: f32[16,16], index: 0, kind: input, shape index: {}]
  %s1 = inlined_call_operand.hbm [shape: f32[8,16], index: 1, kind: input, shape index: {}]
  %s2 = inlined_call_operand.vmem [shape: f32[1,16], index: 2, kind: input, shape index: {}]
  %s3 = inlined_call_operand.vmem [shape: f32[1,8], index: 3, kind: input, shape index: {}]
  %s4 = inlined_call_operand.hbm [shape: f32[1,1], index: 4, kind: output, shape index: {}]
  %s5 = sld [smem:[#allocation0]]
  $region48: #{tpu_custom_call.1} parent=0
    _
  %s7 = ssub.s32 1, %s5
  %s8 = scalar_select 0, %s7, %s5
  $region1: #{tpu_custom_call.1} parent=0
    #allocation2 [shape = 'u8[8192]{0}', space=vmem, size = 0x2000, scoped, tag = 'input window, operand 0, single buffered']
    #allocation3 [shape = 's32[1]{0}', space=sflag, size = 0x4, scoped, tag = 'scoped memory for tpu_custom_call.1']
    #allocation4 [shape = 's32[1]{0}', space=sflag, size = 0x4, scoped, tag = 'scoped memory for tpu_custom_call.1']
    #allocation5 [shape = 'u8[4096]{0}', space=vmem, size = 0x1000, scoped, tag = 'input window, operand 1, single buffered']
    #allocation6 [shape = 's32[1]{0}', space=sflag, size = 0x4, scoped, tag = 'scoped memory for tpu_custom_call.1']
    #allocation7 [shape = 'u8[512]{0}', space=vmem, size = 0x400, scoped, tag = 'output window, operand 0, single buffered']
    %9 = vsyncpa [#allocation3], 0
    %10 = vsyncpa [#allocation6], 0
    %11 = vsyncpa [#allocation4], 0
    // Predicated region
    $region2: #{tpu_custom_call.1} parent=1 // pred_check
      _
    $region3: #{tpu_custom_call.1} parent=1 // pred_check_branch
      %13 = sbr.rel (0) target = $region5
    $region4: #{tpu_custom_call.1} parent=1 // pred_region
      %15 = vsyncadd [#allocation3], 0
      %s16 = sshll.u32 %s0, 4
      %s17 = int_to_ptr.hbm [resolvable:$true] %s16
      %s18 = sshll.u32 [#allocation2], 4
      %s19 = int_to_ptr.vmem [resolvable:$true] %s18
      %24 = dma.hbm_to_vmem [thread:$0]  %s17, 256, %s19, [#allocation3], 128, 128, 8
    $region5: #{tpu_custom_call.1} parent=1 // pred_fallthru
      _
    // Predicated region
    $region6: #{tpu_custom_call.1} parent=1 // pred_check
      _
    $region7: #{tpu_custom_call.1} parent=1 // pred_check_branch
      %26 = sbr.rel (0) target = $region9
    $region8: #{tpu_custom_call.1} parent=1 // pred_region
      %28 = vsyncadd [#allocation6], 0
      %s30 = sshll.u32 %s1, 4
      %s31 = int_to_ptr.hbm [resolvable:$true] %s30
      %s32 = sshll.u32 [#allocation5], 4
      %s33 = int_to_ptr.vmem [resolvable:$true] %s32
      %35 = dma.hbm_to_vmem [thread:$0]  %s31, 128, %s33, [#allocation6]
    $region9: #{tpu_custom_call.1} parent=1 // pred_fallthru
      _
    // Predicated region
    $region10: #{tpu_custom_call.1} parent=1 // pred_check
      _
    $region11: #{tpu_custom_call.1} parent=1 // pred_check_branch
      %37 = sbr.rel (0) target = $region13
    $region12: #{tpu_custom_call.1} parent=1 // pred_region
      _
    $region13: #{tpu_custom_call.1} parent=1 // pred_fallthru
      _
    // Predicated region
    $region14: #{tpu_custom_call.1} parent=1 // pred_check
      _
    $region15: #{tpu_custom_call.1} parent=1 // pred_check_branch
      %39 = sbr.rel (0) target = $region17
    $region16: #{tpu_custom_call.1} parent=1 // pred_region
      _
    $region17: #{tpu_custom_call.1} parent=1 // pred_fallthru
      _
    // Predicated region
    $region18: #{tpu_custom_call.1} parent=1 // pred_check
      _
    $region19: #{tpu_custom_call.1} parent=1 // pred_check_branch
      %41 = sbr.rel (0) target = $region21
    $region20: #{tpu_custom_call.1} parent=1 // pred_region
      %43 = dma.done [#allocation3], 256
    $region21: #{tpu_custom_call.1} parent=1 // pred_fallthru
      _
    // Predicated region
    $region22: #{tpu_custom_call.1} parent=1 // pred_check
      _
    $region23: #{tpu_custom_call.1} parent=1 // pred_check_branch
      %45 = sbr.rel (0) target = $region25
    $region24: #{tpu_custom_call.1} parent=1 // pred_region
      %47 = dma.done [#allocation6], 128
    $region25: #{tpu_custom_call.1} parent=1 // pred_fallthru
      _
    %v48 = vld [vmem:[#allocation2] sm:$0xff]
    %v49 = vld [vmem:[#allocation2 + $0x8] sm:$0xff]
    %v50 = vld [vmem:[#allocation5] sm:$0xff]
    %v51 = vld [vmem:[%s2] sm:$0x1]
    %v52 = vld [vmem:[%s3] sm:$0x1]
    // While loop
    $region26: #{tpu_custom_call.1} parent=1 // loop_pre_header
      _
    $region27: #{tpu_custom_call.1} parent=1 // loop_header
      %s54 = sphi 0, %s118
      %v55 = vphi 0.0, %v94
      %s56 = sphi inf, %s117
      %p57 = scmp.lt.s32.totalorder %s54, 20
      %p58 = scmp.ge.f32.partialorder %s56, 0.0001
      %p59 = pnand %p57, %p58
      %p60 = pneg %p59
    $region28: #{tpu_custom_call.1} parent=1 // loop_header_branch
      %62 = sbr.rel (%p59) target = $region32
    $region29: #{tpu_custom_call.1} parent=1 // loop_body
      %v63 = vmul.f32 %v55, 1.442695
      %v64 = vpow.pop %v63
      %v65 = vmul.f32 %v51, %v64
      %vm66 = vcmask 130048
      %v68 = vsel %vm66, %v65, 0
      %70 = vmatpush.msra.mxu0 0.0
      %71 = vmatpush.msra.mxu0 0.0
      %72 = vmatpush.msra.mxu0 0.0
      %73 = vmatpush.msra.mxu0 0.0
      %74 = vmatpush.msra.mxu0 0.0
      %75 = vmatpush.msra.mxu0 0.0
      %76 = vmatpush.msra.mxu0 0.0
      %77 = vmatpush.msra.mxu0 0.0
      %78 = vmatpush.msra.mxu0 0.0
      %79 = vmatpush.msra.mxu0 0.0
      %80 = vmatpush.msra.mxu0 0.0
      %81 = vmatpush.msra.mxu0 0.0
      %82 = vmatpush.msra.mxu0 0.0
      %83 = vmatpush.msra.mxu0 0.0
      %84 = vmatpush.msra.mxu0 %v49
      %85 = vmatpush.msra.mxu0 %v48
      %86 = vmatmul.f32.gmra.mxu0 %v68
      %v87 = vpop.f32.mrf.mxu0
      %v88 = vadd.f32 1e-07, %v87
      %89 = vdwg.mxu0
      %v90 = vlog2.pop %v88
      %v91 = vmul.f32 %v90, 0.6931472
      %v92 = vsub.f32 0.0, %v91
      %v93 = vadd.f32 %v55, %v92
      %v94 = vmul.f32 %v93, 0.5
      %v95 = vsub.f32 %v94, %v55
      %v96 = vand.u32 2147483647, %v95
      %vm97 = vcmask 122880
      %v98 = vsel %vm97, %v96, 0.0
      %99 = vadd.xlane.f32.xlu0 %v98
      %v100 = vpop.xlane.xlu0 %99
      %v101 = vrot.slane %v100, 4
      %v102 = vadd.f32 %v100, %v101
      %v103 = vrot.slane %v102, 2
      %v104 = vadd.f32 %v102, %v103
      %v105 = vrot.slane %v104, 1
      %v106 = vadd.f32 %v104, %v105
      %s107 = vtos %v106
      %v108 = vrcp.pop 16.0
      %v109 = vmul.f32 16.0, %v108
      %v110 = vsub.f32 1.0, %v109
      %v111 = vmul.f32 %v108, %v110
      %v112 = vadd.f32 %v108, %v111
      %vm113 = vweird.f32 %v108
      %v114 = vsel %vm113, %v108, %v112
      %s115 = vtos %v114
      %s116 = smul.f32 %s107, %s115
      %s117 = smul.f32 %s116, 0.1
      %s118 = sadd.s32 %s54, 1
    $region30: #{tpu_custom_call.1} parent=1 // loop_footer
      _
    $region31: #{tpu_custom_call.1} parent=1 // loop_footer_branch
      %53 = sbr.rel target = $region27
    $region32: #{tpu_custom_call.1} parent=1 // loop_exit
      _
    // While loop
    $region33: #{tpu_custom_call.1} parent=1 // loop_pre_header
      _
    $region34: #{tpu_custom_call.1} parent=1 // loop_header
      %s120 = sphi 0, %s217
      %v121 = vphi 0.0, %v193
      %v122 = vphi 0.0, %v160
      %s123 = sphi inf, %s216
      %p124 = scmp.lt.s32.totalorder %s120, 200
      %p125 = scmp.ge.f32.partialorder %s123, 0.0001
      %p126 = pnand %p124, %p125
      %p127 = pneg %p126
    $region35: #{tpu_custom_call.1} parent=1 // loop_header_branch
      %129 = sbr.rel (%p126) target = $region39
    $region36: #{tpu_custom_call.1} parent=1 // loop_body
      %v130 = vmul.f32 %v121, 1.442695
      %v131 = vpow.pop %v130
      %v132 = vmul.f32 %v52, %v131
      %vm133 = vcmask 64512
      %v135 = vsel %vm133, %v132, 0
      %137 = vmatpush.msra.mxu0 0.0
      %138 = vmatpush.msra.mxu0 0.0
      %139 = vmatpush.msra.mxu0 0.0
      %140 = vmatpush.msra.mxu0 0.0
      %141 = vmatpush.msra.mxu0 0.0
      %142 = vmatpush.msra.mxu0 0.0
      %143 = vmatpush.msra.mxu0 0.0
      %144 = vmatpush.msra.mxu0 0.0
      %145 = vmatpush.msra.mxu0 0.0
      %146 = vmatpush.msra.mxu0 0.0
      %147 = vmatpush.msra.mxu0 0.0
      %148 = vmatpush.msra.mxu0 0.0
      %149 = vmatpush.msra.mxu0 0.0
      %150 = vmatpush.msra.mxu0 0.0
      %151 = vmatpush.msra.mxu0 0.0
      %152 = vmatpush.msra.mxu0 %v50
      %153 = vmatmul.f32.gmra.mxu0 %v135
      %v154 = vpop.f32.mrf.mxu0
      %v155 = vadd.f32 1e-07, %v154
      %156 = vdwg.mxu0
      %v157 = vlog2.pop %v155
      %v158 = vmul.f32 %v157, 0.6931472
      %v159 = vsub.f32 0.0, %v158
      %v160 = vmul.f32 %v159, 0.90909094
      %v161 = vmul.f32 %v160, 1.442695
      %v162 = vpow.pop %v161
      %v163 = vmul.f32 %v51, %v162
      %vm164 = vcmask 130048
      %v166 = vsel %vm164, %v163, 0
      %v169 = vsel %vm164, %v50, 0
      %171 = vmatpush.xpose.msra.mxu0 0.0
      %172 = vmatpush.xpose.msra.mxu0 0.0
      %173 = vmatpush.xpose.msra.mxu0 0.0
      %174 = vmatpush.xpose.msra.mxu0 0.0
      %175 = vmatpush.xpose.msra.mxu0 0.0
      %176 = vmatpush.xpose.msra.mxu0 0.0
      %177 = vmatpush.xpose.msra.mxu0 0.0
      %178 = vmatpush.xpose.msra.mxu0 0.0
      %179 = vmatpush.xpose.msra.mxu0 0.0
      %180 = vmatpush.xpose.msra.mxu0 0.0
      %181 = vmatpush.xpose.msra.mxu0 0.0
      %182 = vmatpush.xpose.msra.mxu0 0.0
      %183 = vmatpush.xpose.msra.mxu0 0.0
      %184 = vmatpush.xpose.msra.mxu0 0.0
      %185 = vmatpush.xpose.msra.mxu0 0.0
      %186 = vmatpush.xpose.msra.mxu0 %v169
      %187 = vmatmul.f32.gmra.mxu0 %v166
      %v188 = vpop.f32.mrf.mxu0
      %v189 = vadd.f32 1e-07, %v188
      %190 = vdwg.mxu0
      %v191 = vlog2.pop %v189
      %v192 = vmul.f32 %v191, 0.6931472
      %v193 = vsub.f32 0.0, %v192
      %v194 = vsub.f32 %v193, %v121
      %v195 = vand.u32 2147483647, %v194
      %vm196 = vcmask 57344
      %v197 = vsel %vm196, %v195, 0.0
      %198 = vadd.xlane.f32.xlu0 %v197
      %v199 = vpop.xlane.xlu0 %198
      %v200 = vrot.slane %v199, 4
      %v201 = vadd.f32 %v199, %v200
      %v202 = vrot.slane %v201, 2
      %v203 = vadd.f32 %v201, %v202
      %v204 = vrot.slane %v203, 1
      %v205 = vadd.f32 %v203, %v204
      %s206 = vtos %v205
      %v207 = vrcp.pop 8.0
      %v208 = vmul.f32 8.0, %v207
      %v209 = vsub.f32 1.0, %v208
      %v210 = vmul.f32 %v207, %v209
      %v211 = vadd.f32 %v207, %v210
      %vm212 = vweird.f32 %v207
      %v213 = vsel %vm212, %v207, %v211
      %s214 = vtos %v213
      %s215 = smul.f32 %s206, %s214
      %s216 = smul.f32 %s215, 0.1
      %s217 = sadd.s32 %s120, 1
    $region37: #{tpu_custom_call.1} parent=1 // loop_footer
      _
    $region38: #{tpu_custom_call.1} parent=1 // loop_footer_branch
      %119 = sbr.rel target = $region34
    $region39: #{tpu_custom_call.1} parent=1 // loop_exit
      _
    %v218 = vmul.f32 %v55, 1.442695
    %v219 = vpow.pop %v218
    %v220 = vmul.f32 %v51, %v219
    %vm221 = vcmask 130048
    %v223 = vsel %vm221, %v220, 0
    %225 = vmatpush.msra.mxu0 0.0
    %226 = vmatpush.msra.mxu0 0.0
    %227 = vmatpush.msra.mxu0 0.0
    %228 = vmatpush.msra.mxu0 0.0
    %229 = vmatpush.msra.mxu0 0.0
    %230 = vmatpush.msra.mxu0 0.0
    %231 = vmatpush.msra.mxu0 0.0
    %232 = vmatpush.msra.mxu0 0.0
    %233 = vmatpush.msra.mxu0 0.0
    %234 = vmatpush.msra.mxu0 0.0
    %235 = vmatpush.msra.mxu0 0.0
    %236 = vmatpush.msra.mxu0 0.0
    %237 = vmatpush.msra.mxu0 0.0
    %238 = vmatpush.msra.mxu0 0.0
    %239 = vmatpush.msra.mxu0 %v49
    %240 = vmatpush.msra.mxu0 %v48
    %241 = vmatmul.f32.gmra.mxu0 %v223
    %v242 = vpop.f32.mrf.mxu0
    %v243 = vadd.f32 1e-07, %v242
    %244 = vdwg.mxu0
    %v245 = vlog2.pop %v243
    %v246 = vmul.f32 %v245, 0.6931472
    %v247 = vsub.f32 0.0, %v246
    %v248 = vmul.f32 %v247, 0.1
    %v249 = vmul.f32 %v121, 0.1
    %v250 = vmul.f32 %v122, 0.1
    %v251 = vsub.f32 0.0, %v250
    %v252 = vmul.f32 %v251, 1.442695
    %v253 = vpow.pop %v252
    %v254 = vsub.f32 1.0, %v253
    %v255 = vsub.f32 %v254, %v248
    %v256 = vmul.f32 %v255, %v51
    %vm257 = vcmask 122880
    %v258 = vsel %vm257, %v256, 0.0
    %259 = vadd.xlane.f32.xlu0 %v258
    %v260 = vpop.xlane.xlu0 %259
    %v261 = vrot.slane %v260, 4
    %v262 = vadd.f32 %v260, %v261
    %v263 = vrot.slane %v262, 2
    %v264 = vadd.f32 %v262, %v263
    %v265 = vrot.slane %v264, 1
    %v266 = vadd.f32 %v264, %v265
    %s267 = vtos %v266
    %v268 = vstv %s267
    %v269 = vmul.f32 %v52, %v249
    %vm270 = vcmask 57344
    %v271 = vsel %vm270, %v269, 0.0
    %272 = vadd.xlane.f32.xlu0 %v271
    %v273 = vpop.xlane.xlu0 %272
    %v274 = vrot.slane %v273, 4
    %v275 = vadd.f32 %v273, %v274
    %v276 = vrot.slane %v275, 2
    %v277 = vadd.f32 %v275, %v276
    %v278 = vrot.slane %v277, 1
    %v279 = vadd.f32 %v277, %v278
    %s280 = vtos %v279
    %v281 = vstv %s280
    %v282 = vadd.f32 %v268, %v281
    %v283 = vmul.f32 %v282, 1000.0
    %vm284 = vcmask 0
    %285 = vst.msk [vmem:[#allocation7] sm:$0x1] %vm284, %v283
    // Predicated region
    $region40: #{tpu_custom_call.1} parent=1 // pred_check
      _
    $region41: #{tpu_custom_call.1} parent=1 // pred_check_branch
      %287 = sbr.rel (0) target = $region43
    $region42: #{tpu_custom_call.1} parent=1 // pred_region
      %289 = vsyncadd [#allocation4], 0
      %s291 = sshll.u32 [#allocation7], 4
      %s292 = int_to_ptr.vmem [resolvable:$true] %s291
      %s293 = sshll.u32 %s4, 4
      %s294 = int_to_ptr.hbm [resolvable:$true] %s293
      %296 = dma.vmem_to_hbm [thread:$0]  %s292, 16, %s294, [#allocation4]
    $region43: #{tpu_custom_call.1} parent=1 // pred_fallthru
      _
    // Predicated region
    $region44: #{tpu_custom_call.1} parent=1 // pred_check
      _
    $region45: #{tpu_custom_call.1} parent=1 // pred_check_branch
      %298 = sbr.rel (0) target = $region47
    $region46: #{tpu_custom_call.1} parent=1 // pred_region
      %300 = dma.done [#allocation4], 16
    $region47: #{tpu_custom_call.1} parent=1 // pred_fallthru
      _
    %301 = vsyncpa [#allocation3], 1
    %302 = vsyncpa [#allocation6], 1
    %303 = vsyncpa [#allocation4], 1

</llo_original>
